<compile_context>
chip_gen: v7x
topology: tpu7x:2x2x1
jax: 0.10.0
libtpu: 0.0.40
codegen_flags: <defaults>
</compile_context>

<pallas_src>
import jax
import jax.numpy as jnp
from jax.experimental import pallas as pl
from jax.experimental.pallas import tpu as pltpu

BN_EPS = 1e-5


def _value_head_kernel(s_ref, x_ref, cw_ref, w1_ref, b1_ref, w2_ref,
                       o_ref, y_ref):
    # s_ref : SMEM f32[4] = [bn_gamma, bn_beta, fc2_bias, conv_bias]
    # x_ref : (tb, C, HW) batch tile (pipelined / double-buffered per grid step)
    # cw_ref: (C, 1)   conv1 weight                (resident)
    # w1_ref: (HW,256) fc1 weight                  (resident)
    # b1_ref: (1, 256) fc1 bias                    (resident)
    # w2_ref: (256, 1) fc2 weight                  (resident)
    # o_ref : (B, 1)   output                      (resident, written last step)
    # y_ref : VMEM scratch (B, HW) — conv output, persists across grid steps
    i = pl.program_id(0)
    nsteps = pl.num_programs(0)
    tb = x_ref.shape[0]
    B, HW = y_ref.shape

    gamma = s_ref[0]
    beta = s_ref[1]
    fc2_b = s_ref[2]
    conv_b = s_ref[3]

    cw_col = cw_ref[...].astype(jnp.float32)          # (C, 1), loop-invariant

    base = i * tb
    valid = jnp.minimum(tb, B - base)                 # rows of this tile that exist

    # ---- phase 1: 1x1 conv for this tile (VPU mul + cross-sublane reduce) ----
    # y[b, h] = sum_c x[b, c, h] * cw[c] + conv_b, written at absolute row index.
    @pl.loop(0, valid)
    def _(r):
        xr = x_ref[r].astype(jnp.float32)                          # (C, HW)
        yrow = jnp.sum(xr * cw_col, axis=0, keepdims=True)         # (1, HW)
        y_ref[pl.ds(base + r, 1), :] = yrow + conv_b

    # ---- phase 2 (last step): BN(batch stats) + ReLU + fc1 + ReLU + fc2 + tanh ----
    @pl.when(i == nsteps - 1)
    def _():
        y = y_ref[...]                                             # (B, HW) — tiny, resident
        n = float(B * HW)
        mean = jnp.sum(y, keepdims=True) / n                       # (1, 1)
        centered = y - mean
        var = jnp.sum(centered * centered, keepdims=True) / n      # biased variance
        inv = jax.lax.rsqrt(var + BN_EPS)
        yn = centered * (inv * gamma) + beta
        yn = jnp.maximum(yn, 0.0)                                  # ReLU
        h = jnp.dot(yn, w1_ref[...], preferred_element_type=jnp.float32) + b1_ref[...]
        h = jnp.maximum(h, 0.0)                                    # ReLU
        v = jnp.dot(h, w2_ref[...], preferred_element_type=jnp.float32) + fc2_b
        o_ref[...] = jnp.tanh(v)                                   # (B, 1)


def _pick_batch_tile(B, C, HW, x_itemsize, *,
                     budget_bytes=40 * 1024 * 1024, max_tb=512):
    """Largest batch tile such that 2 double-buffered x tiles + resident
    (B, HW) activation + weights fit a conservative cross-generation VMEM budget
    (v7x has only 64 MiB physical).  Accounts for HW -> 128 lane padding."""
    lane = ((HW + 127) // 128) * 128
    x_row = C * lane * x_itemsize                      # padded bytes per batch row
    y_all = B * lane * 4                               # resident conv activation
    w_bytes = (C * 128 + HW * 256 + 256 + 256) * 4     # resident weights (rough)
    avail = budget_bytes - y_all - w_bytes - (2 << 20) # headroom for temporaries
    cap = max(1, avail // (2 * x_row))                 # 2 = double buffering
    cap = min(cap, max_tb)
    if B <= cap:
        return int(B)                                  # single grid step
    tb = int(cap)
    if tb >= 8:
        tb -= tb % 8                                   # tidy DMA sizes
    return max(tb, 1)


def value_head_forward(x_nchw, params, *, batch_tile=None,
                       vmem_limit_bytes=56 * 1024 * 1024):
    """x_nchw: (B, 256, H, W), f32 or bf16 — same convention as the PyTorch module."""
    B, C, H, W = x_nchw.shape
    HW = H * W
    x = x_nchw.reshape(B, C, HW)                       # free trailing-dim reshape, dtype kept

    if batch_tile is None:
        batch_tile = _pick_batch_tile(B, C, HW, jnp.dtype(x.dtype).itemsize)
    tb = int(batch_tile)
    nsteps = (B + tb - 1) // tb                        # cdiv: ragged tail handled in-kernel

    scalars = jnp.array(
        [params["bn_gamma"], params["bn_beta"], params["fc2_b"], params["conv_b"]],
        dtype=jnp.float32)

    grid_spec = pltpu.PrefetchScalarGridSpec(
        num_scalar_prefetch=0,
        grid=(nsteps,),
        in_specs=[
            pl.BlockSpec(memory_space=pltpu.MemorySpace.SMEM),   # scalar params
            pl.BlockSpec((tb, C, HW), lambda i: (i, 0, 0)),      # x tiles (pipelined)
            pl.BlockSpec((C, 1),    lambda i: (0, 0)),           # conv weight (resident)
            pl.BlockSpec((HW, 256), lambda i: (0, 0)),           # fc1 weight  (resident)
            pl.BlockSpec((1, 256),  lambda i: (0, 0)),           # fc1 bias    (resident)
            pl.BlockSpec((256, 1),  lambda i: (0, 0)),           # fc2 weight  (resident)
        ],
        out_specs=pl.BlockSpec((B, 1), lambda i: (0, 0)),        # resident; written last step
        scratch_shapes=[
            pltpu.VMEM((B, HW), jnp.float32),                    # conv output, persists
        ],
    )

    return pl.pallas_call(
        _value_head_kernel,
        out_shape=jax.ShapeDtypeStruct((B, 1), jnp.float32),
        grid_spec=grid_spec,
        compiler_params=pltpu.CompilerParams(
            # Single sequential axis: BN stats are global over the batch.
            dimension_semantics=("arbitrary",),
            vmem_limit_bytes=vmem_limit_bytes,
        ),
    )(scalars, x, params["conv_w"], params["fc1_w"], params["fc1_b"], params["fc2_w"])


def value_head_reference(x_nchw, params):
    """Pure-JAX reference with the same semantics as the PyTorch forward."""
    B, C, H, W = x_nchw.shape
    y = jnp.einsum("bchw,c->bhw", x_nchw.astype(jnp.float32),
                   params["conv_w"][:, 0]) + params["conv_b"]
    mean = jnp.mean(y)
    var = jnp.mean((y - mean) ** 2)
    y = (y - mean) / jnp.sqrt(var + BN_EPS) * params["bn_gamma"] + params["bn_beta"]
    y = jnp.maximum(y, 0.0).reshape(B, H * W)
    h = jnp.maximum(y @ params["fc1_w"] + params["fc1_b"][0], 0.0)
    v = h @ params["fc2_w"] + params["fc2_b"]
    return jnp.tanh(v)


def init_params(key, state_shape):
    HW = 1
    for d in state_shape:
        HW *= d
    ks = jax.random.split(key, 4)
    return {
        # conv1: Conv2d(256, 1, 1) -> weight (1, 256, 1, 1) stored as (256, 1)
        "conv_w": 0.05 * jax.random.normal(ks[0], (256, 1), jnp.float32),
        "conv_b": 0.1,
        # bn1: BatchNorm2d(1) affine params
        "bn_gamma": 1.2,
        "bn_beta": -0.05,
        # fc1: Linear(HW, 256) -> stored transposed (HW, 256)
        "fc1_w": 0.05 * jax.random.normal(ks[1], (HW, 256), jnp.float32),
        "fc1_b": 0.05 * jax.random.normal(ks[2], (1, 256), jnp.float32),
        # fc2: Linear(256, 1) -> stored transposed (256, 1)
        "fc2_w": 0.05 * jax.random.normal(ks[3], (256, 1), jnp.float32),
        "fc2_b": 0.02,
    }


if __name__ == "__main__":
    B, C, H, W = 2, 256, 8, 8          # state_shape = (8, 8) -> flatten length 64
    key = jax.random.PRNGKey(0)
    kx, kp = jax.random.split(key)
    x = jax.random.normal(kx, (B, C, H, W), jnp.float32)
    params = init_params(kp, (H, W))

    out = jax.block_until_ready(value_head_forward(x, params))
    ref = jax.block_until_ready(value_head_reference(x, params))

    assert out.shape == (B, 1), out.shape
    if not jnp.allclose(out, ref, atol=1e-4, rtol=1e-4):
        raise AssertionError(f"mismatch: kernel={out}, ref={ref}")
    print("KERNEL_OK")
</pallas_src>

<mosaic_0001>
module attributes {stable_mosaic.version = 11 : i64} {
  func.func @_value_head_kernel(%arg0: i32, %arg1: memref<4xf32, #tpu.memory_space<smem>>, %arg2: memref<2x256x64xf32, #tpu.memory_space<vmem>>, %arg3: memref<256x1xf32, #tpu.memory_space<vmem>>, %arg4: memref<64x256xf32, #tpu.memory_space<vmem>>, %arg5: memref<1x256xf32, #tpu.memory_space<vmem>>, %arg6: memref<256x1xf32, #tpu.memory_space<vmem>>, %arg7: memref<2x1xf32, #tpu.memory_space<vmem>>, %arg8: memref<2x64xf32, #tpu.memory_space<vmem>>) attributes {dimension_semantics = [#tpu.dimension_semantics<arbitrary>], iteration_bounds = array<i64: 1>, scalar_prefetch = 0 : i64, scratch_operands = 1 : i64, tpu.core_type = #tpu.core_type<tc>, window_params = [{transform_indices = @transform_0, window_bounds = array<i64: 4>}, {transform_indices = @transform_1, window_bounds = array<i64: 2, 256, 64>}, {pipeline_mode = #tpu.pipeline_mode<synchronous>, transform_indices = @transform_2, window_bounds = array<i64: 256, 1>}, {pipeline_mode = #tpu.pipeline_mode<synchronous>, transform_indices = @transform_3, window_bounds = array<i64: 64, 256>}, {pipeline_mode = #tpu.pipeline_mode<synchronous>, transform_indices = @transform_4, window_bounds = array<i64: 1, 256>}, {pipeline_mode = #tpu.pipeline_mode<synchronous>, transform_indices = @transform_5, window_bounds = array<i64: 256, 1>}, {pipeline_mode = #tpu.pipeline_mode<synchronous>, transform_indices = @transform_6, window_bounds = array<i64: 2, 1>}]} {
    %c0 = arith.constant 0 : index
    %0 = memref.load %arg1[%c0] : memref<4xf32, #tpu.memory_space<smem>>
    %c1 = arith.constant 1 : index
    %1 = memref.load %arg1[%c1] : memref<4xf32, #tpu.memory_space<smem>>
    %c2 = arith.constant 2 : index
    %2 = memref.load %arg1[%c2] : memref<4xf32, #tpu.memory_space<smem>>
    %c3 = arith.constant 3 : index
    %3 = memref.load %arg1[%c3] : memref<4xf32, #tpu.memory_space<smem>>
    %c0_0 = arith.constant 0 : index
    %c0_1 = arith.constant 0 : index
    %4 = vector.load %arg3[%c0_0, %c0_1] : memref<256x1xf32, #tpu.memory_space<vmem>>, vector<256x1xf32>
    %c2_i32 = arith.constant 2 : i32
    %5 = arith.muli %arg0, %c2_i32 : i32
    %c2_i32_2 = arith.constant 2 : i32
    %6 = arith.subi %c2_i32_2, %5 : i32
    %c2_i32_3 = arith.constant 2 : i32
    %7 = arith.minsi %c2_i32_3, %6 : i32
    %c0_i32 = arith.constant 0 : i32
    %8 = arith.subi %7, %c0_i32 : i32
    %c1_i32 = arith.constant 1 : i32
    %c1_i32_4 = arith.constant 1 : i32
    %9 = arith.subi %c1_i32, %c1_i32_4 : i32
    %10 = arith.addi %8, %9 : i32
    %c1_i32_5 = arith.constant 1 : i32
    %11 = arith.divsi %10, %c1_i32_5 : i32
    %c1_i32_6 = arith.constant 1 : i32
    %c0_i32_7 = arith.constant 0 : i32
    %c0_i32_8 = arith.constant 0 : i32
    %12 = arith.subi %11, %c0_i32_8 : i32
    %13 = arith.addi %c0_i32_8, %12 : i32
    %c1_i32_9 = arith.constant 1 : i32
    scf.for %arg9 = %c0_i32_8 to %13 step %c1_i32_9  : i32 {
      %17 = arith.muli %arg9, %c1_i32_6 : i32
      %18 = arith.addi %c0_i32_7, %17 : i32
      %19 = arith.index_cast %18 : i32 to index
      %c0_12 = arith.constant 0 : index
      %c0_13 = arith.constant 0 : index
      %20 = vector.load %arg2[%19, %c0_12, %c0_13] : memref<2x256x64xf32, #tpu.memory_space<vmem>>, vector<1x256x64xf32>
      %21 = vector.shape_cast %20 : vector<1x256x64xf32> to vector<256x64xf32>
      %22 = vector.broadcast %4 : vector<256x1xf32> to vector<256x64xf32>
      %23 = arith.mulf %21, %22 : vector<256x64xf32>
      %cst = arith.constant dense<0.000000e+00> : vector<64xf32>
      %24 = vector.multi_reduction <add>, %23, %cst [0] : vector<256x64xf32> to vector<64xf32>
      %25 = vector.shape_cast %24 : vector<64xf32> to vector<1x64xf32>
      %26 = vector.broadcast %3 : f32 to vector<1x64xf32>
      %27 = arith.addf %25, %26 : vector<1x64xf32>
      %28 = arith.addi %5, %18 : i32
      %29 = arith.index_cast %28 : i32 to index
      %c0_14 = arith.constant 0 : index
      %30 = vector.load %arg8[%29, %c0_14] : memref<2x64xf32, #tpu.memory_space<vmem>>, vector<1x64xf32>
      tpu.vector_store %arg8[%29, %c0_14], %27 {strides = array<i32>} : memref<2x64xf32, #tpu.memory_space<vmem>>, vector<1x64xf32>,
    }
    %c0_i32_10 = arith.constant 0 : i32
    %14 = arith.cmpi eq, %arg0, %c0_i32_10 : i32
    %15 = arith.extui %14 : i1 to i32
    %c0_i32_11 = arith.constant 0 : i32
    %16 = arith.cmpi ne, %15, %c0_i32_11 : i32
    scf.if %16 {
      %c0_12 = arith.constant 0 : index
      %c0_13 = arith.constant 0 : index
      %17 = vector.load %arg8[%c0_12, %c0_13] : memref<2x64xf32, #tpu.memory_space<vmem>>, vector<2x64xf32>
      %18 = vector.shape_cast %17 : vector<2x64xf32> to vector<1x2x64xf32>
      %cst = arith.constant dense<0.000000e+00> : vector<1xf32>
      %19 = vector.multi_reduction <add>, %18, %cst [1, 2] : vector<1x2x64xf32> to vector<1xf32>
      %20 = vector.shape_cast %19 : vector<1xf32> to vector<1x1x1xf32>
      %21 = vector.extract %20[0, 0, 0] : f32 from vector<1x1x1xf32>
      %22 = vector.broadcast %21 : f32 to vector<1x1xf32>
      %cst_14 = arith.constant 1.280000e+02 : f32
      %23 = vector.broadcast %cst_14 : f32 to vector<1x1xf32>
      %24 = arith.divf %22, %23 : vector<1x1xf32>
      %25 = vector.broadcast %24 : vector<1x1xf32> to vector<2x64xf32>
      %26 = arith.subf %17, %25 : vector<2x64xf32>
      %27 = arith.mulf %26, %26 : vector<2x64xf32>
      %28 = vector.shape_cast %27 : vector<2x64xf32> to vector<1x2x64xf32>
      %cst_15 = arith.constant dense<0.000000e+00> : vector<1xf32>
      %29 = vector.multi_reduction <add>, %28, %cst_15 [1, 2] : vector<1x2x64xf32> to vector<1xf32>
      %30 = vector.shape_cast %29 : vector<1xf32> to vector<1x1x1xf32>
      %31 = vector.extract %30[0, 0, 0] : f32 from vector<1x1x1xf32>
      %32 = vector.broadcast %31 : f32 to vector<1x1xf32>
      %cst_16 = arith.constant 1.280000e+02 : f32
      %33 = vector.broadcast %cst_16 : f32 to vector<1x1xf32>
      %34 = arith.divf %32, %33 : vector<1x1xf32>
      %cst_17 = arith.constant 9.99999974E-6 : f32
      %35 = vector.broadcast %cst_17 : f32 to vector<1x1xf32>
      %36 = arith.addf %34, %35 : vector<1x1xf32>
      %37 = math.rsqrt %36 : vector<1x1xf32>
      %38 = vector.broadcast %0 : f32 to vector<1x1xf32>
      %39 = arith.mulf %37, %38 : vector<1x1xf32>
      %40 = vector.broadcast %39 : vector<1x1xf32> to vector<2x64xf32>
      %41 = arith.mulf %26, %40 : vector<2x64xf32>
      %42 = vector.broadcast %1 : f32 to vector<2x64xf32>
      %43 = arith.addf %41, %42 : vector<2x64xf32>
      %cst_18 = arith.constant 0.000000e+00 : f32
      %44 = vector.broadcast %cst_18 : f32 to vector<2x64xf32>
      %45 = arith.maximumf %43, %44 : vector<2x64xf32>
      %c0_19 = arith.constant 0 : index
      %c0_20 = arith.constant 0 : index
      %46 = vector.load %arg4[%c0_19, %c0_20] : memref<64x256xf32, #tpu.memory_space<vmem>>, vector<64x256xf32>
      %cst_21 = arith.constant dense<0.000000e+00> : vector<2x256xf32>
      %47 = tpu.matmul %45, %46, %cst_21 {dimension_numbers = #tpu.dot_dimension_numbers<[1], [0], [0], [1], [0, 0, 1, 1], [], []>} : vector<2x64xf32>, vector<64x256xf32>, vector<2x256xf32> -> vector<2x256xf32>
      %c0_22 = arith.constant 0 : index
      %c0_23 = arith.constant 0 : index
      %48 = vector.load %arg5[%c0_22, %c0_23] : memref<1x256xf32, #tpu.memory_space<vmem>>, vector<1x256xf32>
      %49 = vector.broadcast %48 : vector<1x256xf32> to vector<2x256xf32>
      %50 = arith.addf %47, %49 : vector<2x256xf32>
      %cst_24 = arith.constant 0.000000e+00 : f32
      %51 = vector.broadcast %cst_24 : f32 to vector<2x256xf32>
      %52 = arith.maximumf %50, %51 : vector<2x256xf32>
      %c0_25 = arith.constant 0 : index
      %c0_26 = arith.constant 0 : index
      %53 = vector.load %arg6[%c0_25, %c0_26] : memref<256x1xf32, #tpu.memory_space<vmem>>, vector<256x1xf32>
      %cst_27 = arith.constant dense<0.000000e+00> : vector<2x1xf32>
      %54 = tpu.matmul %52, %53, %cst_27 {dimension_numbers = #tpu.dot_dimension_numbers<[1], [0], [0], [1], [0, 0, 1, 1], [], []>} : vector<2x256xf32>, vector<256x1xf32>, vector<2x1xf32> -> vector<2x1xf32>
      %55 = vector.broadcast %2 : f32 to vector<2x1xf32>
      %56 = arith.addf %54, %55 : vector<2x1xf32>
      %57 = math.tanh %56 : vector<2x1xf32>
      %c0_28 = arith.constant 0 : index
      %c0_29 = arith.constant 0 : index
      %58 = vector.load %arg7[%c0_28, %c0_29] : memref<2x1xf32, #tpu.memory_space<vmem>>, vector<2x1xf32>
      tpu.vector_store %arg7[%c0_28, %c0_29], %57 {strides = array<i32>} : memref<2x1xf32, #tpu.memory_space<vmem>>, vector<2x1xf32>,
    } else {
    }
    return
  }
  func.func @transform_0(%arg0: i32) -> i32 {
    %c0_i32 = arith.constant 0 : i32
    %c0_i32_0 = arith.constant 0 : i32
    return %c0_i32 : i32
  }
  func.func @transform_1(%arg0: i32) -> (i32, i32, i32) {
    %c0_i32 = arith.constant 0 : i32
    %c0_i32_0 = arith.constant 0 : i32
    %c0_i32_1 = arith.constant 0 : i32
    return %arg0, %c0_i32, %c0_i32_0 : i32, i32, i32
  }
  func.func @transform_2(%arg0: i32) -> (i32, i32) {
    %c0_i32 = arith.constant 0 : i32
    %c0_i32_0 = arith.constant 0 : i32
    %c0_i32_1 = arith.constant 0 : i32
    return %c0_i32, %c0_i32_0 : i32, i32
  }
  func.func @transform_3(%arg0: i32) -> (i32, i32) {
    %c0_i32 = arith.constant 0 : i32
    %c0_i32_0 = arith.constant 0 : i32
    %c0_i32_1 = arith.constant 0 : i32
    return %c0_i32, %c0_i32_0 : i32, i32
  }
  func.func @transform_4(%arg0: i32) -> (i32, i32) {
    %c0_i32 = arith.constant 0 : i32
    %c0_i32_0 = arith.constant 0 : i32
    %c0_i32_1 = arith.constant 0 : i32
    return %c0_i32, %c0_i32_0 : i32, i32
  }
  func.func @transform_5(%arg0: i32) -> (i32, i32) {
    %c0_i32 = arith.constant 0 : i32
    %c0_i32_0 = arith.constant 0 : i32
    %c0_i32_1 = arith.constant 0 : i32
    return %c0_i32, %c0_i32_0 : i32, i32
  }
  func.func @transform_6(%arg0: i32) -> (i32, i32) {
    %c0_i32 = arith.constant 0 : i32
    %c0_i32_0 = arith.constant 0 : i32
    %c0_i32_1 = arith.constant 0 : i32
    return %c0_i32, %c0_i32_0 : i32, i32
  }
}

</mosaic_0001>

<llo_original>
// kernel: tpu_custom_call.1
$region0: #{tpu_custom_call.1}
  #allocation0 [shape = 'u32[]', space=smem, size = 0x4, offset = 0x4, fixed_abs, tag = 'smem constant byte address 0x4 - core index']
  #allocation1 [shape = 'u32[144,128]{1,0:T(1,128)}', space=vmem, size = 0x12000, scoped, tag = 'internal scratch']
  #allocation2 [shape = 'f32[2,64]{1,0:T(2,128)}', space=vmem, size = 0x400, scoped, tag = 'scratch operand']
  %s0 = inlined_call_operand.vmem [shape: f32[4], index: 0, kind: input, shape index: {}]
  %s1 = inlined_call_operand.vmem [shape: f32[2,256,64], index: 1, kind: input, shape index: {}]
  %s2 = inlined_call_operand.vmem [shape: f32[256,1], index: 2, kind: input, shape index: {}]
  %s3 = inlined_call_operand.vmem [shape: f32[64,256], index: 3, kind: input, shape index: {}]
  %s4 = inlined_call_operand.vmem [shape: f32[1,256], index: 4, kind: input, shape index: {}]
  %s5 = inlined_call_operand.vmem [shape: f32[256,1], index: 5, kind: input, shape index: {}]
  %s6 = inlined_call_operand.vmem [shape: f32[2,1], index: 6, kind: output, shape index: {}]
  %s7 = sld [smem:[#allocation0]]
  $region49: #{tpu_custom_call.1} parent=0
    _
  %s9 = ssub.s32 1, %s7
  %s10 = scalar_select 0, %s9, %s7
  $region1: #{tpu_custom_call.1} parent=0
    #allocation3 [shape = 'u8[512]{0}', space=smem, size = 0x200, scoped, tag = 'input window, operand 0, single buffered']
    #allocation4 [shape = 's32[1]{0}', space=sflag, size = 0x4, scoped, tag = 'scoped memory for tpu_custom_call.1']
    %11 = vsyncpa [#allocation4], 0
    // Predicated region
    $region2: #{tpu_custom_call.1} parent=1 // pred_check
      _
    $region3: #{tpu_custom_call.1} parent=1 // pred_check_branch
      %13 = sbr.rel (0) target = $region5
    $region4: #{tpu_custom_call.1} parent=1 // pred_region
      %s15 = ssub.s32 16, 16
      %16 = vsyncadd [#allocation4], %s15
      %s18 = sshll.u32 %s0, 4
      %s19 = int_to_ptr.vmem [resolvable:$true] %s18
      %21 = dma.vmem_to_smem %s19, 16, [#allocation3], [#allocation4]
    $region5: #{tpu_custom_call.1} parent=1 // pred_fallthru
      _
    // Predicated region
    $region6: #{tpu_custom_call.1} parent=1 // pred_check
      _
    $region7: #{tpu_custom_call.1} parent=1 // pred_check_branch
      %23 = sbr.rel (0) target = $region9
    $region8: #{tpu_custom_call.1} parent=1 // pred_region
      _
    $region9: #{tpu_custom_call.1} parent=1 // pred_fallthru
      _
    // Predicated region
    $region10: #{tpu_custom_call.1} parent=1 // pred_check
      _
    $region11: #{tpu_custom_call.1} parent=1 // pred_check_branch
      %25 = sbr.rel (0) target = $region13
    $region12: #{tpu_custom_call.1} parent=1 // pred_region
      _
    $region13: #{tpu_custom_call.1} parent=1 // pred_fallthru
      _
    // Predicated region
    $region14: #{tpu_custom_call.1} parent=1 // pred_check
      _
    $region15: #{tpu_custom_call.1} parent=1 // pred_check_branch
      %27 = sbr.rel (0) target = $region17
    $region16: #{tpu_custom_call.1} parent=1 // pred_region
      _
    $region17: #{tpu_custom_call.1} parent=1 // pred_fallthru
      _
    // Predicated region
    $region18: #{tpu_custom_call.1} parent=1 // pred_check
      _
    $region19: #{tpu_custom_call.1} parent=1 // pred_check_branch
      %29 = sbr.rel (0) target = $region21
    $region20: #{tpu_custom_call.1} parent=1 // pred_region
      _
    $region21: #{tpu_custom_call.1} parent=1 // pred_fallthru
      _
    // Predicated region
    $region22: #{tpu_custom_call.1} parent=1 // pred_check
      _
    $region23: #{tpu_custom_call.1} parent=1 // pred_check_branch
      %31 = sbr.rel (0) target = $region25
    $region24: #{tpu_custom_call.1} parent=1 // pred_region
      _
    $region25: #{tpu_custom_call.1} parent=1 // pred_fallthru
      _
    // Predicated region
    $region26: #{tpu_custom_call.1} parent=1 // pred_check
      _
    $region27: #{tpu_custom_call.1} parent=1 // pred_check_branch
      %33 = sbr.rel (0) target = $region29
    $region28: #{tpu_custom_call.1} parent=1 // pred_region
      %34 = dma.done [#allocation4], 16
    $region29: #{tpu_custom_call.1} parent=1 // pred_fallthru
      _
    %35 = sfence
    %s36 = sld [smem:[#allocation3]]
    %s37 = sld [smem:[#allocation3 + $0x1]]
    %s38 = sld [smem:[#allocation3 + $0x2]]
    %s39 = sld [smem:[#allocation3 + $0x3]]
    %v40 = vld [vmem:[%s2] sm:$0xff]
    %v41 = vld [vmem:[%s2 + $0x8] sm:$0xff]
    %v42 = vld [vmem:[%s2 + $0x10] sm:$0xff]
    %v43 = vld [vmem:[%s2 + $0x18] sm:$0xff]
    %v44 = vld [vmem:[%s2 + $0x20] sm:$0xff]
    %v45 = vld [vmem:[%s2 + $0x28] sm:$0xff]
    %v46 = vld [vmem:[%s2 + $0x30] sm:$0xff]
    %v47 = vld [vmem:[%s2 + $0x38] sm:$0xff]
    %v48 = vld [vmem:[%s2 + $0x40] sm:$0xff]
    %v49 = vld [vmem:[%s2 + $0x48] sm:$0xff]
    %v50 = vld [vmem:[%s2 + $0x50] sm:$0xff]
    %v51 = vld [vmem:[%s2 + $0x58] sm:$0xff]
    %v52 = vld [vmem:[%s2 + $0x60] sm:$0xff]
    %v53 = vld [vmem:[%s2 + $0x68] sm:$0xff]
    %v54 = vld [vmem:[%s2 + $0x70] sm:$0xff]
    %v55 = vld [vmem:[%s2 + $0x78] sm:$0xff]
    %v56 = vld [vmem:[%s2 + $0x80] sm:$0xff]
    %v57 = vld [vmem:[%s2 + $0x88] sm:$0xff]
    %v58 = vld [vmem:[%s2 + $0x90] sm:$0xff]
    %v59 = vld [vmem:[%s2 + $0x98] sm:$0xff]
    %v60 = vld [vmem:[%s2 + $0xa0] sm:$0xff]
    %v61 = vld [vmem:[%s2 + $0xa8] sm:$0xff]
    %v62 = vld [vmem:[%s2 + $0xb0] sm:$0xff]
    %v63 = vld [vmem:[%s2 + $0xb8] sm:$0xff]
    %v64 = vld [vmem:[%s2 + $0xc0] sm:$0xff]
    %v65 = vld [vmem:[%s2 + $0xc8] sm:$0xff]
    %v66 = vld [vmem:[%s2 + $0xd0] sm:$0xff]
    %v67 = vld [vmem:[%s2 + $0xd8] sm:$0xff]
    %v68 = vld [vmem:[%s2 + $0xe0] sm:$0xff]
    %v69 = vld [vmem:[%s2 + $0xe8] sm:$0xff]
    %v70 = vld [vmem:[%s2 + $0xf0] sm:$0xff]
    %v71 = vld [vmem:[%s2 + $0xf8] sm:$0xff]
    %s72 = smul.u32 0, 2
    %s73 = ssub.s32 2, %s72
    %p74 = scmp.lt.s32.totalorder %s73, 2
    %s75 = scalar_select %p74, %s73, 2
    // While loop
    $region30: #{tpu_custom_call.1} parent=1 // loop_pre_header
      _
    $region31: #{tpu_custom_call.1} parent=1 // loop_header
      %s77 = sphi 0, %s79
      %p78 = scmp.ge.s32.totalorder %s77, %s75
    $region32: #{tpu_custom_call.1} parent=1 // loop_header_branch
      %81 = sbr.rel (%p78) target = $region36
    $region33: #{tpu_custom_call.1} parent=1 // loop_body
      %s82 = smul.u32 %s77, 256
      %s83 = scalar_lea.vmem %s1, %s82
      %v84 = vld [vmem:[%s83] sm:$0xff]
      %v85 = vld [vmem:[%s83 + $0x8] sm:$0xff]
      %v86 = vld [vmem:[%s83 + $0x10] sm:$0xff]
      %v87 = vld [vmem:[%s83 + $0x18] sm:$0xff]
      %v88 = vld [vmem:[%s83 + $0x20] sm:$0xff]
      %v89 = vld [vmem:[%s83 + $0x28] sm:$0xff]
      %v90 = vld [vmem:[%s83 + $0x30] sm:$0xff]
      %v91 = vld [vmem:[%s83 + $0x38] sm:$0xff]
      %v92 = vld [vmem:[%s83 + $0x40] sm:$0xff]
      %v93 = vld [vmem:[%s83 + $0x48] sm:$0xff]
      %v94 = vld [vmem:[%s83 + $0x50] sm:$0xff]
      %v95 = vld [vmem:[%s83 + $0x58] sm:$0xff]
      %v96 = vld [vmem:[%s83 + $0x60] sm:$0xff]
      %v97 = vld [vmem:[%s83 + $0x68] sm:$0xff]
      %v98 = vld [vmem:[%s83 + $0x70] sm:$0xff]
      %v99 = vld [vmem:[%s83 + $0x78] sm:$0xff]
      %v100 = vld [vmem:[%s83 + $0x80] sm:$0xff]
      %v101 = vld [vmem:[%s83 + $0x88] sm:$0xff]
      %v102 = vld [vmem:[%s83 + $0x90] sm:$0xff]
      %v103 = vld [vmem:[%s83 + $0x98] sm:$0xff]
      %v104 = vld [vmem:[%s83 + $0xa0] sm:$0xff]
      %v105 = vld [vmem:[%s83 + $0xa8] sm:$0xff]
      %v106 = vld [vmem:[%s83 + $0xb0] sm:$0xff]
      %v107 = vld [vmem:[%s83 + $0xb8] sm:$0xff]
      %v108 = vld [vmem:[%s83 + $0xc0] sm:$0xff]
      %v109 = vld [vmem:[%s83 + $0xc8] sm:$0xff]
      %v110 = vld [vmem:[%s83 + $0xd0] sm:$0xff]
      %v111 = vld [vmem:[%s83 + $0xd8] sm:$0xff]
      %v112 = vld [vmem:[%s83 + $0xe0] sm:$0xff]
      %v113 = vld [vmem:[%s83 + $0xe8] sm:$0xff]
      %v114 = vld [vmem:[%s83 + $0xf0] sm:$0xff]
      %v115 = vld [vmem:[%s83 + $0xf8] sm:$0xff]
      %117 = vset.pattern.permute.xlu0 0
      %118 = vperm.xlu0 %117, %v40
      %v119 = vpop.permute.xlu0 %118
      %122 = vset.pattern.permute.xlu0 0
      %123 = vperm.xlu0 %122, %v41
      %v124 = vpop.permute.xlu0 %123
      %127 = vset.pattern.permute.xlu0 0
      %128 = vperm.xlu0 %127, %v42
      %v129 = vpop.permute.xlu0 %128
      %132 = vset.pattern.permute.xlu0 0
      %133 = vperm.xlu0 %132, %v43
      %v134 = vpop.permute.xlu0 %133
      %137 = vset.pattern.permute.xlu0 0
      %138 = vperm.xlu0 %137, %v44
      %v139 = vpop.permute.xlu0 %138
      %142 = vset.pattern.permute.xlu0 0
      %143 = vperm.xlu0 %142, %v45
      %v144 = vpop.permute.xlu0 %143
      %147 = vset.pattern.permute.xlu0 0
      %148 = vperm.xlu0 %147, %v46
      %v149 = vpop.permute.xlu0 %148
      %152 = vset.pattern.permute.xlu0 0
      %153 = vperm.xlu0 %152, %v47
      %v154 = vpop.permute.xlu0 %153
      %157 = vset.pattern.permute.xlu0 0
      %158 = vperm.xlu0 %157, %v48
      %v159 = vpop.permute.xlu0 %158
      %162 = vset.pattern.permute.xlu0 0
      %163 = vperm.xlu0 %162, %v49
      %v164 = vpop.permute.xlu0 %163
      %167 = vset.pattern.permute.xlu0 0
      %168 = vperm.xlu0 %167, %v50
      %v169 = vpop.permute.xlu0 %168
      %172 = vset.pattern.permute.xlu0 0
      %173 = vperm.xlu0 %172, %v51
      %v174 = vpop.permute.xlu0 %173
      %177 = vset.pattern.permute.xlu0 0
      %178 = vperm.xlu0 %177, %v52
      %v179 = vpop.permute.xlu0 %178
      %182 = vset.pattern.permute.xlu0 0
      %183 = vperm.xlu0 %182, %v53
      %v184 = vpop.permute.xlu0 %183
      %187 = vset.pattern.permute.xlu0 0
      %188 = vperm.xlu0 %187, %v54
      %v189 = vpop.permute.xlu0 %188
      %192 = vset.pattern.permute.xlu0 0
      %193 = vperm.xlu0 %192, %v55
      %v194 = vpop.permute.xlu0 %193
      %197 = vset.pattern.permute.xlu0 0
      %198 = vperm.xlu0 %197, %v56
      %v199 = vpop.permute.xlu0 %198
      %202 = vset.pattern.permute.xlu0 0
      %203 = vperm.xlu0 %202, %v57
      %v204 = vpop.permute.xlu0 %203
      %207 = vset.pattern.permute.xlu0 0
      %208 = vperm.xlu0 %207, %v58
      %v209 = vpop.permute.xlu0 %208
      %212 = vset.pattern.permute.xlu0 0
      %213 = vperm.xlu0 %212, %v59
      %v214 = vpop.permute.xlu0 %213
      %217 = vset.pattern.permute.xlu0 0
      %218 = vperm.xlu0 %217, %v60
      %v219 = vpop.permute.xlu0 %218
      %222 = vset.pattern.permute.xlu0 0
      %223 = vperm.xlu0 %222, %v61
      %v224 = vpop.permute.xlu0 %223
      %227 = vset.pattern.permute.xlu0 0
      %228 = vperm.xlu0 %227, %v62
      %v229 = vpop.permute.xlu0 %228
      %232 = vset.pattern.permute.xlu0 0
      %233 = vperm.xlu0 %232, %v63
      %v234 = vpop.permute.xlu0 %233
      %237 = vset.pattern.permute.xlu0 0
      %238 = vperm.xlu0 %237, %v64
      %v239 = vpop.permute.xlu0 %238
      %242 = vset.pattern.permute.xlu0 0
      %243 = vperm.xlu0 %242, %v65
      %v244 = vpop.permute.xlu0 %243
      %247 = vset.pattern.permute.xlu0 0
      %248 = vperm.xlu0 %247, %v66
      %v249 = vpop.permute.xlu0 %248
      %252 = vset.pattern.permute.xlu0 0
      %253 = vperm.xlu0 %252, %v67
      %v254 = vpop.permute.xlu0 %253
      %257 = vset.pattern.permute.xlu0 0
      %258 = vperm.xlu0 %257, %v68
      %v259 = vpop.permute.xlu0 %258
      %262 = vset.pattern.permute.xlu0 0
      %263 = vperm.xlu0 %262, %v69
      %v264 = vpop.permute.xlu0 %263
      %267 = vset.pattern.permute.xlu0 0
      %268 = vperm.xlu0 %267, %v70
      %v269 = vpop.permute.xlu0 %268
      %272 = vset.pattern.permute.xlu0 0
      %273 = vperm.xlu0 %272, %v71
      %v274 = vpop.permute.xlu0 %273
      %v276 = vmul.f32 %v84, %v119
      %v277 = vmul.f32 %v85, %v124
      %v278 = vmul.f32 %v86, %v129
      %v279 = vmul.f32 %v87, %v134
      %v280 = vmul.f32 %v88, %v139
      %v281 = vmul.f32 %v89, %v144
      %v282 = vmul.f32 %v90, %v149
      %v283 = vmul.f32 %v91, %v154
      %v284 = vmul.f32 %v92, %v159
      %v285 = vmul.f32 %v93, %v164
      %v286 = vmul.f32 %v94, %v169
      %v287 = vmul.f32 %v95, %v174
      %v288 = vmul.f32 %v96, %v179
      %v289 = vmul.f32 %v97, %v184
      %v290 = vmul.f32 %v98, %v189
      %v291 = vmul.f32 %v99, %v194
      %v292 = vmul.f32 %v100, %v199
      %v293 = vmul.f32 %v101, %v204
      %v294 = vmul.f32 %v102, %v209
      %v295 = vmul.f32 %v103, %v214
      %v296 = vmul.f32 %v104, %v219
      %v297 = vmul.f32 %v105, %v224
      %v298 = vmul.f32 %v106, %v229
      %v299 = vmul.f32 %v107, %v234
      %v300 = vmul.f32 %v108, %v239
      %v301 = vmul.f32 %v109, %v244
      %v302 = vmul.f32 %v110, %v249
      %v303 = vmul.f32 %v111, %v254
      %v304 = vmul.f32 %v112, %v259
      %v305 = vmul.f32 %v113, %v264
      %v306 = vmul.f32 %v114, %v269
      %v307 = vmul.f32 %v115, %v274
      %vm308 = vcmask 523264
      %v309 = vsel %vm308, %v276, 0.0
      %v310 = vsel %vm308, %v277, 0.0
      %v311 = vadd.f32 %v309, %v310
      %v312 = vsel %vm308, %v278, 0.0
      %v313 = vadd.f32 %v311, %v312
      %v314 = vsel %vm308, %v279, 0.0
      %v315 = vadd.f32 %v313, %v314
      %v316 = vsel %vm308, %v280, 0.0
      %v317 = vadd.f32 %v315, %v316
      %v318 = vsel %vm308, %v281, 0.0
      %v319 = vadd.f32 %v317, %v318
      %v320 = vsel %vm308, %v282, 0.0
      %v321 = vadd.f32 %v319, %v320
      %v322 = vsel %vm308, %v283, 0.0
      %v323 = vadd.f32 %v321, %v322
      %v324 = vsel %vm308, %v284, 0.0
      %v325 = vadd.f32 %v323, %v324
      %v326 = vsel %vm308, %v285, 0.0
      %v327 = vadd.f32 %v325, %v326
      %v328 = vsel %vm308, %v286, 0.0
      %v329 = vadd.f32 %v327, %v328
      %v330 = vsel %vm308, %v287, 0.0
      %v331 = vadd.f32 %v329, %v330
      %v332 = vsel %vm308, %v288, 0.0
      %v333 = vadd.f32 %v331, %v332
      %v334 = vsel %vm308, %v289, 0.0
      %v335 = vadd.f32 %v333, %v334
      %v336 = vsel %vm308, %v290, 0.0
      %v337 = vadd.f32 %v335, %v336
      %v338 = vsel %vm308, %v291, 0.0
      %v339 = vadd.f32 %v337, %v338
      %v340 = vsel %vm308, %v292, 0.0
      %v341 = vadd.f32 %v339, %v340
      %v342 = vsel %vm308, %v293, 0.0
      %v343 = vadd.f32 %v341, %v342
      %v344 = vsel %vm308, %v294, 0.0
      %v345 = vadd.f32 %v343, %v344
      %v346 = vsel %vm308, %v295, 0.0
      %v347 = vadd.f32 %v345, %v346
      %v348 = vsel %vm308, %v296, 0.0
      %v349 = vadd.f32 %v347, %v348
      %v350 = vsel %vm308, %v297, 0.0
      %v351 = vadd.f32 %v349, %v350
      %v352 = vsel %vm308, %v298, 0.0
      %v353 = vadd.f32 %v351, %v352
      %v354 = vsel %vm308, %v299, 0.0
      %v355 = vadd.f32 %v353, %v354
      %v356 = vsel %vm308, %v300, 0.0
      %v357 = vadd.f32 %v355, %v356
      %v358 = vsel %vm308, %v301, 0.0
      %v359 = vadd.f32 %v357, %v358
      %v360 = vsel %vm308, %v302, 0.0
      %v361 = vadd.f32 %v359, %v360
      %v362 = vsel %vm308, %v303, 0.0
      %v363 = vadd.f32 %v361, %v362
      %v364 = vsel %vm308, %v304, 0.0
      %v365 = vadd.f32 %v363, %v364
      %v366 = vsel %vm308, %v305, 0.0
      %v367 = vadd.f32 %v365, %v366
      %v368 = vsel %vm308, %v306, 0.0
      %v369 = vadd.f32 %v367, %v368
      %v370 = vsel %vm308, %v307, 0.0
      %v371 = vadd.f32 %v369, %v370
      %v372 = vrot.slane %v371, 4
      %v373 = vadd.f32 %v371, %v372
      %v374 = vrot.slane %v373, 2
      %v375 = vadd.f32 %v373, %v374
      %v376 = vrot.slane %v375, 1
      %v377 = vadd.f32 %v375, %v376
      %v378 = vstv %s39
      %v379 = vadd.f32 %v377, %v378
      %s380 = sadd.s32 %s72, %s77
      %s381 = scalar_lea.vmem [#allocation2], %s380
      %vm382 = vcmask 516096
      %383 = vst.msk [vmem:[%s381] sm:$0x1] %vm382, %v379
    $region34: #{tpu_custom_call.1} parent=1 // loop_footer
      %s79 = sadd.s32 %s77, 1
    $region35: #{tpu_custom_call.1} parent=1 // loop_footer_branch
      %76 = sbr.rel target = $region31
    $region36: #{tpu_custom_call.1} parent=1 // loop_exit
      _
    %p384 = scmp.eq.s32.totalorder 0, 0
    // Predicated region
    $region37: #{tpu_custom_call.1} parent=1 // pred_check
      %p385 = pneg %p384
    $region38: #{tpu_custom_call.1} parent=1 // pred_check_branch
      %387 = sbr.rel (%p385) target = $region40
    $region39: #{tpu_custom_call.1} parent=1 // pred_region
      %v388 = vld [vmem:[#allocation2] sm:$0x3]
      %vm389 = vcmask 517120
      %v390 = vsel %vm389, %v388, 0.0
      %391 = vadd.xlane.f32.xlu0 %v390
      %v392 = vpop.xlane.xlu0 %391
      %v393 = vrot.slane %v392, 4
      %v394 = vadd.f32 %v392, %v393
      %v395 = vrot.slane %v394, 2
      %v396 = vadd.f32 %v394, %v395
      %v397 = vrot.slane %v396, 1
      %v398 = vadd.f32 %v396, %v397
      %s399 = vtos %v398
      %v400 = vstv %s399
      %v401 = vrcp.pop 128.0
      %v402 = vmul.f32 %v400, %v401
      %v403 = vsub.f32 %v388, %v402
      %v404 = vmul.f32 %v403, %v403
      %v405 = vsel %vm389, %v404, 0.0
      %406 = vadd.xlane.f32.xlu0 %v405
      %v407 = vpop.xlane.xlu0 %406
      %v408 = vrot.slane %v407, 4
      %v409 = vadd.f32 %v407, %v408
      %v410 = vrot.slane %v409, 2
      %v411 = vadd.f32 %v409, %v410
      %v412 = vrot.slane %v411, 1
      %v413 = vadd.f32 %v411, %v412
      %s414 = vtos %v413
      %v415 = vstv %s414
      %v416 = vmul.f32 %v415, %v401
      %v417 = vadd.f32 %v416, 1e-05
      %v418 = vrsqrt.pop %v417
      %v419 = vstv %s36
      %v420 = vmul.f32 %v418, %v419
      %v421 = vmul.f32 %v403, %v420
      %v422 = vstv %s37
      %v423 = vadd.f32 %v421, %v422
      %v424 = vmax.f32 %v423, 0.0
      %v425 = vld [vmem:[%s3] sm:$0xff]
      %v426 = vld [vmem:[%s3 + $0x8] sm:$0xff]
      %v427 = vld [vmem:[%s3 + $0x10] sm:$0xff]
      %v428 = vld [vmem:[%s3 + $0x18] sm:$0xff]
      %v429 = vld [vmem:[%s3 + $0x20] sm:$0xff]
      %v430 = vld [vmem:[%s3 + $0x28] sm:$0xff]
      %v431 = vld [vmem:[%s3 + $0x30] sm:$0xff]
      %v432 = vld [vmem:[%s3 + $0x38] sm:$0xff]
      %v433 = vld [vmem:[%s3 + $0x40] sm:$0xff]
      %v434 = vld [vmem:[%s3 + $0x48] sm:$0xff]
      %v435 = vld [vmem:[%s3 + $0x50] sm:$0xff]
      %v436 = vld [vmem:[%s3 + $0x58] sm:$0xff]
      %v437 = vld [vmem:[%s3 + $0x60] sm:$0xff]
      %v438 = vld [vmem:[%s3 + $0x68] sm:$0xff]
      %v439 = vld [vmem:[%s3 + $0x70] sm:$0xff]
      %v440 = vld [vmem:[%s3 + $0x78] sm:$0xff]
      %v441 = vld [vmem:[%s4] sm:$0x3]
      %v443 = vlaneseq
      %v444 = vshrl.u32 %v443, 7
      %v445 = vsub.s32 0, %v444
      %v446 = vrot.slane %v441, %v445
      %v447 = vlaneseq
      %v448 = vshrl.u32 %v447, 7
      %v449 = vsub.s32 1, %v448
      %v450 = vrot.slane %v441, %v449
      %vm453 = vcmask 523264
      %v455 = vsel %vm453, %v424, 0
      %457 = vmatprep.subr.mxu0 %v426
      %458 = vmatpush1.msra.mxu0 %v425
      %459 = vmatprep.subr.mxu0 %v428
      %460 = vmatpush1.msra.mxu0 %v427
      %461 = vmatprep.subr.mxu0 %v430
      %462 = vmatpush1.msra.mxu0 %v429
      %463 = vmatprep.subr.mxu0 %v432
      %464 = vmatpush1.msra.mxu0 %v431
      %465 = vmatprep.subr.mxu0 %v434
      %466 = vmatpush1.msra.mxu0 %v433
      %467 = vmatprep.subr.mxu0 %v436
      %468 = vmatpush1.msra.mxu0 %v435
      %469 = vmatprep.subr.mxu0 %v438
      %470 = vmatpush1.msra.mxu0 %v437
      %471 = vmatprep.subr.mxu0 %v440
      %472 = vmatpush1.msra.mxu0 %v439
      %473 = vmatprep.subr.mxu0 0.0
      %474 = vmatpush1.msra.mxu0 0.0
      %475 = vmatprep.subr.mxu0 0.0
      %476 = vmatpush1.msra.mxu0 0.0
      %477 = vmatprep.subr.mxu0 0.0
      %478 = vmatpush1.msra.mxu0 0.0
      %479 = vmatprep.subr.mxu0 0.0
      %480 = vmatpush1.msra.mxu0 0.0
      %481 = vmatprep.subr.mxu0 0.0
      %482 = vmatpush1.msra.mxu0 0.0
      %483 = vmatprep.subr.mxu0 0.0
      %484 = vmatpush1.msra.mxu0 0.0
      %485 = vmatprep.subr.mxu0 0.0
      %486 = vmatpush1.msra.mxu0 0.0
      %487 = vmatprep.subr.mxu0 0.0
      %488 = vmatpush1.msra.mxu0 0.0
      %489 = vmatprep.subr.mxu0 0.0
      %490 = vmatpush1.msra.mxu0 0.0
      %491 = vmatprep.subr.mxu0 0.0
      %492 = vmatpush1.msra.mxu0 0.0
      %493 = vmatprep.subr.mxu0 0.0
      %494 = vmatpush1.msra.mxu0 0.0
      %495 = vmatprep.subr.mxu0 0.0
      %496 = vmatpush1.msra.mxu0 0.0
      %497 = vmatprep.subr.mxu0 0.0
      %498 = vmatpush1.msra.mxu0 0.0
      %499 = vmatprep.subr.mxu0 0.0
      %500 = vmatpush1.msra.mxu0 0.0
      %501 = vmatprep.subr.mxu0 0.0
      %502 = vmatpush1.msra.mxu0 0.0
      %503 = vmatprep.subr.mxu0 0.0
      %504 = vmatpush1.msra.mxu0 0.0
      %505 = vmatprep.subr.mxu0 0.0
      %506 = vmatpush1.msra.mxu0 0.0
      %507 = vmatprep.subr.mxu0 0.0
      %508 = vmatpush1.msra.mxu0 0.0
      %509 = vmatprep.subr.mxu0 0.0
      %510 = vmatpush1.msra.mxu0 0.0
      %511 = vmatprep.subr.mxu0 0.0
      %512 = vmatpush1.msra.mxu0 0.0
      %513 = vmatprep.subr.mxu0 0.0
      %514 = vmatpush1.msra.mxu0 0.0
      %515 = vmatprep.subr.mxu0 0.0
      %516 = vmatpush1.msra.mxu0 0.0
      %517 = vmatprep.subr.mxu0 0.0
      %518 = vmatpush1.msra.mxu0 0.0
      %519 = vmatprep.subr.mxu0 0.0
      %520 = vmatpush1.msra.mxu0 0.0
      %521 = vmatprep.mubr.f32.mxu0 0.0
      %522 = vmatmul.mubr.f32.gmra.mrb[0].mxu0 %v455
      %v523 = vpop.f32.mrb[0].mxu0
      %v524 = vadd.f32 %v446, %v523
      %v525 = vpop.f32.mrb[0].mxu0
      %v526 = vadd.f32 %v450, %v525
      %527 = vdwg.mxu0
      %v528 = vmax.f32 %v524, 0.0
      %v529 = vmax.f32 %v526, 0.0
      %v530 = vld [vmem:[%s5] sm:$0xff]
      %v531 = vld [vmem:[%s5 + $0x8] sm:$0xff]
      %v532 = vld [vmem:[%s5 + $0x10] sm:$0xff]
      %v533 = vld [vmem:[%s5 + $0x18] sm:$0xff]
      %v534 = vld [vmem:[%s5 + $0x20] sm:$0xff]
      %v535 = vld [vmem:[%s5 + $0x28] sm:$0xff]
      %v536 = vld [vmem:[%s5 + $0x30] sm:$0xff]
      %v537 = vld [vmem:[%s5 + $0x38] sm:$0xff]
      %v538 = vld [vmem:[%s5 + $0x40] sm:$0xff]
      %v539 = vld [vmem:[%s5 + $0x48] sm:$0xff]
      %v540 = vld [vmem:[%s5 + $0x50] sm:$0xff]
      %v541 = vld [vmem:[%s5 + $0x58] sm:$0xff]
      %v542 = vld [vmem:[%s5 + $0x60] sm:$0xff]
      %v543 = vld [vmem:[%s5 + $0x68] sm:$0xff]
      %v544 = vld [vmem:[%s5 + $0x70] sm:$0xff]
      %v545 = vld [vmem:[%s5 + $0x78] sm:$0xff]
      %v546 = vld [vmem:[%s5 + $0x80] sm:$0xff]
      %v547 = vld [vmem:[%s5 + $0x88] sm:$0xff]
      %v548 = vld [vmem:[%s5 + $0x90] sm:$0xff]
      %v549 = vld [vmem:[%s5 + $0x98] sm:$0xff]
      %v550 = vld [vmem:[%s5 + $0xa0] sm:$0xff]
      %v551 = vld [vmem:[%s5 + $0xa8] sm:$0xff]
      %v552 = vld [vmem:[%s5 + $0xb0] sm:$0xff]
      %v553 = vld [vmem:[%s5 + $0xb8] sm:$0xff]
      %v554 = vld [vmem:[%s5 + $0xc0] sm:$0xff]
      %v555 = vld [vmem:[%s5 + $0xc8] sm:$0xff]
      %v556 = vld [vmem:[%s5 + $0xd0] sm:$0xff]
      %v557 = vld [vmem:[%s5 + $0xd8] sm:$0xff]
      %v558 = vld [vmem:[%s5 + $0xe0] sm:$0xff]
      %v559 = vld [vmem:[%s5 + $0xe8] sm:$0xff]
      %v560 = vld [vmem:[%s5 + $0xf0] sm:$0xff]
      %v561 = vld [vmem:[%s5 + $0xf8] sm:$0xff]
      %v562 = vstv %s38
      %563 = vmatprep.subr.mxu0 0.0
      %564 = vmatpush1.msra.mxu0 %v530
      %565 = vmatprep.subr.mxu0 0.0
      %566 = vmatpush1.msra.mxu0 %v531
      %567 = vmatprep.subr.mxu0 0.0
      %568 = vmatpush1.msra.mxu0 %v532
      %569 = vmatprep.subr.mxu0 0.0
      %570 = vmatpush1.msra.mxu0 %v533
      %571 = vmatprep.subr.mxu0 0.0
      %572 = vmatpush1.msra.mxu0 %v534
      %573 = vmatprep.subr.mxu0 0.0
      %574 = vmatpush1.msra.mxu0 %v535
      %575 = vmatprep.subr.mxu0 0.0
      %576 = vmatpush1.msra.mxu0 %v536
      %577 = vmatprep.subr.mxu0 0.0
      %578 = vmatpush1.msra.mxu0 %v537
      %579 = vmatprep.subr.mxu0 0.0
      %580 = vmatpush1.msra.mxu0 %v538
      %581 = vmatprep.subr.mxu0 0.0
      %582 = vmatpush1.msra.mxu0 %v539
      %583 = vmatprep.subr.mxu0 0.0
      %584 = vmatpush1.msra.mxu0 %v540
      %585 = vmatprep.subr.mxu0 0.0
      %586 = vmatpush1.msra.mxu0 %v541
      %587 = vmatprep.subr.mxu0 0.0
      %588 = vmatpush1.msra.mxu0 %v542
      %589 = vmatprep.subr.mxu0 0.0
      %590 = vmatpush1.msra.mxu0 %v543
      %591 = vmatprep.subr.mxu0 0.0
      %592 = vmatpush1.msra.mxu0 %v544
      %593 = vmatprep.subr.mxu0 0.0
      %594 = vmatpush1.msra.mxu0 %v545
      %595 = vmatprep.subr.mxu0 0.0
      %596 = vmatpush1.msra.mxu0 %v546
      %597 = vmatprep.subr.mxu0 0.0
      %598 = vmatpush1.msra.mxu0 %v547
      %599 = vmatprep.subr.mxu0 0.0
      %600 = vmatpush1.msra.mxu0 %v548
      %601 = vmatprep.subr.mxu0 0.0
      %602 = vmatpush1.msra.mxu0 %v549
      %603 = vmatprep.subr.mxu0 0.0
      %604 = vmatpush1.msra.mxu0 %v550
      %605 = vmatprep.subr.mxu0 0.0
      %606 = vmatpush1.msra.mxu0 %v551
      %607 = vmatprep.subr.mxu0 0.0
      %608 = vmatpush1.msra.mxu0 %v552
      %609 = vmatprep.subr.mxu0 0.0
      %610 = vmatpush1.msra.mxu0 %v553
      %611 = vmatprep.subr.mxu0 0.0
      %612 = vmatpush1.msra.mxu0 %v554
      %613 = vmatprep.subr.mxu0 0.0
      %614 = vmatpush1.msra.mxu0 %v555
      %615 = vmatprep.subr.mxu0 0.0
      %616 = vmatpush1.msra.mxu0 %v556
      %617 = vmatprep.subr.mxu0 0.0
      %618 = vmatpush1.msra.mxu0 %v557
      %619 = vmatprep.subr.mxu0 0.0
      %620 = vmatpush1.msra.mxu0 %v558
      %621 = vmatprep.subr.mxu0 0.0
      %622 = vmatpush1.msra.mxu0 %v559
      %623 = vmatprep.subr.mxu0 0.0
      %624 = vmatpush1.msra.mxu0 %v560
      %625 = vmatprep.subr.mxu0 0.0
      %626 = vmatpush1.msra.mxu0 %v561
      %627 = vmatprep.mubr.f32.mxu0 %v529
      %628 = vmatmul.mubr.f32.gmra.mrb[0].mxu0 %v528
      %v629 = vpop.f32.mrb[0].mxu0
      %v630 = vadd.f32 %v562, %v629
      %v631 = vpop.f32.mrb[0].mxu0
      %632 = vdwg.mxu0
      %v633 = vtanh.pop %v630
      %vm634 = vcmask 1024
      %635 = vst.msk [vmem:[%s6] sm:$0x3] %vm634, %v633
    $region40: #{tpu_custom_call.1} parent=1 // pred_fallthru
      _
    // Predicated region
    $region41: #{tpu_custom_call.1} parent=1 // pred_check
      _
    $region42: #{tpu_custom_call.1} parent=1 // pred_check_branch
      %637 = sbr.rel (0) target = $region44
    $region43: #{tpu_custom_call.1} parent=1 // pred_region
      _
    $region44: #{tpu_custom_call.1} parent=1 // pred_fallthru
      _
    // Predicated region
    $region45: #{tpu_custom_call.1} parent=1 // pred_check
      _
    $region46: #{tpu_custom_call.1} parent=1 // pred_check_branch
      %639 = sbr.rel (0) target = $region48
    $region47: #{tpu_custom_call.1} parent=1 // pred_region
      _
    $region48: #{tpu_custom_call.1} parent=1 // pred_fallthru
      _
    %640 = vsyncpa [#allocation4], 1

</llo_original>
